<compile_context>
chip_gen: v5e
topology: v5e:2x2
jax: 0.10.0
libtpu: 0.0.40
codegen_flags: <defaults>
</compile_context>

<pallas_src>
import functools

import jax
import jax.numpy as jnp
from jax.experimental import pallas as pl
from jax.experimental.pallas import tpu as pltpu


def _pad_rows(n):
    # Sublane padding of the second-to-last dim: 8 for f32, 16 for bf16.
    # Pad to 16 always (slight over-estimate for f32 is harmless).
    return ((n + 15) // 16) * 16


def _vmem_caps():
    """(budget_for_tiles, vmem_limit_ceiling) in bytes, generation aware."""
    cap = 64 << 20  # conservative default = v7x physical VMEM per TensorCore
    try:
        info = pltpu.get_tpu_info()
        cap = int(getattr(info, "vmem_capacity_bytes", cap))
    except Exception:
        pass
    # Budget for this kernel's double-buffered tiles; leave compiler scratch
    # headroom: ~48 MB on v7x (64 MiB), ~98 MB on v5e/v6e (128 MiB).
    budget = max(int(cap * 0.75) - (2 << 20), 24 << 20)
    limit_ceiling = cap - (4 << 20)
    return budget, limit_ceiling


def _choose_tile_n(flatten_size, bytes_per_col, budget):
    """Largest lane-aligned tile along flatten_size that fits the VMEM budget.

    Returns (tile_n, num_tiles).  Prefers an exact divisor of flatten_size
    (no remainder block) as long as it costs at most ~2x the minimal number
    of grid steps; otherwise uses a cdiv grid (Pallas pads the final block:
    OOB reads are unspecified, OOB writes discarded -- safe here).
    """
    max_cols = budget // max(bytes_per_col, 1)
    if flatten_size <= max_cols:
        return flatten_size, 1  # single block (block == full dim is allowed)
    limit = max((max_cols // 128) * 128, 128)
    t = limit
    while t >= 128 and t > limit // 2:
        if flatten_size % t == 0:
            return t, flatten_size // t
        t -= 128
    return limit, (flatten_size + limit - 1) // limit


def _decode_pet_kernel(p_ref, wt_ref, init_ref, o_ref):
    # p_ref:    (1, LOW_DIM)       share_intrinsic (same dtype as the weight)
    # wt_ref:   (LOW_DIM, TILE_N)  transposed decoder weight tile (f32/bf16);
    #                              fed to the MXU directly, f32 accumulation.
    # init_ref: (1, TILE_N)        flattened PET init tile (f32 or bf16)
    # o_ref:    (1, TILE_N)        pet_flattened tile (f32)
    acc = jnp.dot(p_ref[...], wt_ref[...], preferred_element_type=jnp.float32)
    o_ref[...] = (acc + init_ref[...].astype(jnp.float32)).astype(o_ref.dtype)


@functools.partial(
    jax.jit,
    static_argnames=("tile_n", "num_tiles", "core_parallel", "vmem_limit"))
def _pet_decode_call(p2, wt, init2, *, tile_n, num_tiles, core_parallel,
                     vmem_limit):
    low_dim = p2.shape[1]
    flatten_size = init2.shape[1]
    w_itemsize = jnp.dtype(wt.dtype).itemsize
    init_itemsize = jnp.dtype(init2.dtype).itemsize

    cost = pl.CostEstimate(
        flops=2 * low_dim * flatten_size,
        transcendentals=0,
        bytes_accessed=(low_dim * flatten_size * w_itemsize   # weight stream
                        + flatten_size * init_itemsize        # init read
                        + flatten_size * 4                    # output write
                        + low_dim * w_itemsize),              # intrinsic
    )

    # CORE_PARALLEL actually shards the grid across v7x's two TensorCores;
    # the plain "parallel" string has near-zero codegen effect but is the
    # proven-safe fallback on single-core generations / older jax.
    sem = (pltpu.CORE_PARALLEL,) if core_parallel else ("parallel",)

    return pl.pallas_call(
        _decode_pet_kernel,
        out_shape=jax.ShapeDtypeStruct((1, flatten_size), jnp.float32),
        grid_spec=pl.GridSpec(
            grid=(num_tiles,),
            in_specs=[
                pl.BlockSpec((1, low_dim), lambda j: (0, 0)),
                pl.BlockSpec((low_dim, tile_n), lambda j: (0, j)),
                pl.BlockSpec((1, tile_n), lambda j: (0, j)),
            ],
            out_specs=pl.BlockSpec((1, tile_n), lambda j: (0, j)),
        ),
        compiler_params=pltpu.CompilerParams(
            dimension_semantics=sem,
            vmem_limit_bytes=int(vmem_limit),
        ),
        cost_estimate=cost,
    )(p2, wt, init2)


def get_high_dim_H_flattened(share_intrinsic, decoder_weight_t, init_flat,
                             max_tile=None):
    """pet_flattened = decoder_<pet>(share_intrinsic) + init_<pet>  (no bias).

    share_intrinsic:  (low_dim,)              float32
    decoder_weight_t: (low_dim, flatten_size) float32 or bfloat16
                      (= nn.Linear.weight.T; bf16 halves HBM traffic)
    init_flat:        (flatten_size,)         float32 or bfloat16
    returns:          (flatten_size,)         float32
    """
    low_dim = int(share_intrinsic.shape[0])
    flatten_size = int(init_flat.shape[0])
    assert decoder_weight_t.shape == (low_dim, flatten_size)

    w_dtype = decoder_weight_t.dtype
    w_itemsize = jnp.dtype(w_dtype).itemsize
    init_itemsize = jnp.dtype(init_flat.dtype).itemsize

    # Per lane-column VMEM cost of one grid step (double buffered):
    #   weight tile: 2 * padded(low_dim) * itemsize
    #   init tile:   2 * 8 * itemsize    ((1, tile_n) pads to 8 sublanes)
    #   out tile:    2 * 8 * 4
    bytes_per_col = (2 * _pad_rows(low_dim) * w_itemsize
                     + 2 * 8 * init_itemsize
                     + 2 * 8 * 4)

    budget, limit_ceiling = _vmem_caps()
    if max_tile is not None:
        budget = min(budget, int(max_tile) * bytes_per_col)
    tile_n, num_tiles = _choose_tile_n(flatten_size, bytes_per_col, budget)

    vmem_need = tile_n * bytes_per_col
    vmem_limit = min(max(vmem_need + (6 << 20), 32 << 20), limit_ceiling)

    p2 = share_intrinsic.reshape(1, low_dim).astype(w_dtype)
    init2 = init_flat.reshape(1, flatten_size)

    # Split the 1-D grid across both TensorCores when it helps (v7x); fall
    # back to the proven plain-parallel grid if core-parallel lowering is
    # unsupported on this chip / jax build.
    want_core_parallel = num_tiles > 1 and num_tiles % 2 == 0
    if want_core_parallel:
        try:
            out = _pet_decode_call(p2, decoder_weight_t, init2,
                                   tile_n=tile_n, num_tiles=num_tiles,
                                   core_parallel=True, vmem_limit=vmem_limit)
            jax.block_until_ready(out)
            return out.reshape(flatten_size)
        except Exception:
            pass
    out = _pet_decode_call(p2, decoder_weight_t, init2,
                           tile_n=tile_n, num_tiles=num_tiles,
                           core_parallel=False, vmem_limit=vmem_limit)
    return out.reshape(flatten_size)


if __name__ == "__main__":
    # Small, shape-consistent stand-ins for the real module sizes
    # (real: flatten_size=1_105_920, low_dimension=args.low_dimension).
    FLATTEN_SIZE = 4096
    LOW_DIM = 32
    R_MEAN, R_STD = 0.0, 0.02

    key = jax.random.PRNGKey(0)
    k_si, k_dec, k_init = jax.random.split(key, 3)

    # share_intrinsic ~ N(r_mean, r_std)
    share_intrinsic = R_MEAN + R_STD * jax.random.normal(
        k_si, (LOW_DIM,), dtype=jnp.float32)

    # decoder_adapter.weight ~ N(0, 0.02), shape (flatten_size, low_dim) in
    # PyTorch; stored transposed here (low_dim, flatten_size).
    decoder_weight_t = 0.02 * jax.random.normal(
        k_dec, (LOW_DIM, FLATTEN_SIZE), dtype=jnp.float32)

    # init_A: flattened pretrained-PET init (synthetic, deterministic).
    init_A = jax.random.normal(k_init, (FLATTEN_SIZE,), dtype=jnp.float32)

    ref = share_intrinsic @ decoder_weight_t + init_A

    # --- f32 weights, single big tile (exact path) ---
    pet_flattened = get_high_dim_H_flattened(
        share_intrinsic, decoder_weight_t, init_A)
    pet_flattened = jax.block_until_ready(pet_flattened)
    assert pet_flattened.shape == (FLATTEN_SIZE,)
    assert jnp.allclose(pet_flattened, ref, atol=1e-5, rtol=1e-5)

    # --- bf16 weights + bf16 init, multi-tile grid (exercises the
    #     core-parallel attempt + fallback and the halved HBM traffic path) ---
    decoder_weight_t_bf16 = decoder_weight_t.astype(jnp.bfloat16)
    init_A_bf16 = init_A.astype(jnp.bfloat16)
    pet_flattened_bf16 = get_high_dim_H_flattened(
        share_intrinsic, decoder_weight_t_bf16, init_A_bf16, max_tile=1024)
    pet_flattened_bf16 = jax.block_until_ready(pet_flattened_bf16)
    assert pet_flattened_bf16.shape == (FLATTEN_SIZE,)
    assert jnp.allclose(pet_flattened_bf16, ref, atol=2e-2, rtol=2e-2)

    print("KERNEL_OK")
</pallas_src>

<mosaic_0001>
module attributes {stable_mosaic.version = 11 : i64} {
  func.func @_decode_pet_kernel(%arg0: i32, %arg1: memref<1x32xf32, #tpu.memory_space<vmem>>, %arg2: memref<32x4096xf32, #tpu.memory_space<vmem>>, %arg3: memref<1x4096xf32, #tpu.memory_space<vmem>>, %arg4: memref<1x4096xf32, #tpu.memory_space<vmem>>) attributes {dimension_semantics = [#tpu.dimension_semantics<parallel>], iteration_bounds = array<i64: 1>, scalar_prefetch = 0 : i64, scratch_operands = 0 : i64, tpu.core_type = #tpu.core_type<tc>, window_params = [{pipeline_mode = #tpu.pipeline_mode<synchronous>, transform_indices = @transform_0, window_bounds = array<i64: 1, 32>}, {transform_indices = @transform_1, window_bounds = array<i64: 32, 4096>}, {transform_indices = @transform_2, window_bounds = array<i64: 1, 4096>}, {transform_indices = @transform_3, window_bounds = array<i64: 1, 4096>}]} {
    %c0 = arith.constant 0 : index
    %c0_0 = arith.constant 0 : index
    %0 = vector.load %arg1[%c0, %c0_0] : memref<1x32xf32, #tpu.memory_space<vmem>>, vector<1x32xf32>
    %c0_1 = arith.constant 0 : index
    %c0_2 = arith.constant 0 : index
    %1 = vector.load %arg2[%c0_1, %c0_2] : memref<32x4096xf32, #tpu.memory_space<vmem>>, vector<32x4096xf32>
    %cst = arith.constant dense<0.000000e+00> : vector<1x4096xf32>
    %2 = tpu.matmul %0, %1, %cst {dimension_numbers = #tpu.dot_dimension_numbers<[1], [0], [0], [1], [0, 0, 1, 1], [], []>} : vector<1x32xf32>, vector<32x4096xf32>, vector<1x4096xf32> -> vector<1x4096xf32>
    %c0_3 = arith.constant 0 : index
    %c0_4 = arith.constant 0 : index
    %3 = vector.load %arg3[%c0_3, %c0_4] : memref<1x4096xf32, #tpu.memory_space<vmem>>, vector<1x4096xf32>
    %4 = arith.addf %2, %3 : vector<1x4096xf32>
    %c0_5 = arith.constant 0 : index
    %c0_6 = arith.constant 0 : index
    %5 = vector.load %arg4[%c0_5, %c0_6] : memref<1x4096xf32, #tpu.memory_space<vmem>>, vector<1x4096xf32>
    tpu.vector_store %arg4[%c0_5, %c0_6], %4 {strides = array<i32>} : memref<1x4096xf32, #tpu.memory_space<vmem>>, vector<1x4096xf32>,
    return
  }
  func.func @transform_0(%arg0: i32) -> (i32, i32) {
    %c0_i32 = arith.constant 0 : i32
    %c0_i32_0 = arith.constant 0 : i32
    %c0_i32_1 = arith.constant 0 : i32
    return %c0_i32, %c0_i32_0 : i32, i32
  }
  func.func @transform_1(%arg0: i32) -> (i32, i32) {
    %c0_i32 = arith.constant 0 : i32
    %c0_i32_0 = arith.constant 0 : i32
    return %c0_i32, %arg0 : i32, i32
  }
  func.func @transform_2(%arg0: i32) -> (i32, i32) {
    %c0_i32 = arith.constant 0 : i32
    %c0_i32_0 = arith.constant 0 : i32
    return %c0_i32, %arg0 : i32, i32
  }
  func.func @transform_3(%arg0: i32) -> (i32, i32) {
    %c0_i32 = arith.constant 0 : i32
    %c0_i32_0 = arith.constant 0 : i32
    return %c0_i32, %arg0 : i32, i32
  }
}

</mosaic_0001>

<llo_original>
// kernel: _pet_decode_call.1
$region0: #{_pet_decode_call.1}
  #allocation0 [shape = 'u32[]', space=smem, size = 0x4, offset = 0x4, fixed_abs, tag = 'smem constant byte address 0x4 - core index']
  #allocation1 [shape = 'u32[72,128]{1,0:T(1,128)}', space=vmem, size = 0x9000, scoped, tag = 'internal scratch']
  %s0 = inlined_call_operand.hbm [shape: f32[1,32], index: 0, kind: input, shape index: {}]
  %s1 = inlined_call_operand.hbm [shape: f32[32,4096], index: 1, kind: input, shape index: {}]
  %s2 = inlined_call_operand.hbm [shape: f32[1,4096], index: 2, kind: input, shape index: {}]
  %s3 = inlined_call_operand.hbm [shape: f32[1,4096], index: 3, kind: output, shape index: {}]
  %s4 = sld [smem:[#allocation0]]
  $region34: #{_pet_decode_call.1} parent=0
    _
  %s6 = ssub.s32 1, %s4
  %s7 = scalar_select 0, %s6, %s4
  $region1: #{_pet_decode_call.1} parent=0
    #allocation2 [shape = 'u8[512]{0}', space=vmem, size = 0x400, scoped, tag = 'input window, operand 0, single buffered']
    #allocation3 [shape = 's32[1]{0}', space=sflag, size = 0x4, scoped, tag = 'scoped memory for _pet_decode_call.1']
    #allocation4 [shape = 's32[1]{0}', space=sflag, size = 0x4, scoped, tag = 'scoped memory for _pet_decode_call.1']
    #allocation5 [shape = 'u8[524288]{0}', space=vmem, size = 0x80000, scoped, tag = 'input window, operand 1, single buffered']
    #allocation6 [shape = 's32[1]{0}', space=sflag, size = 0x4, scoped, tag = 'scoped memory for _pet_decode_call.1']
    #allocation7 [shape = 'u8[16384]{0}', space=vmem, size = 0x4000, scoped, tag = 'input window, operand 2, single buffered']
    #allocation8 [shape = 'u8[16384]{0}', space=vmem, size = 0x4000, scoped, tag = 'output window, operand 0, single buffered']
    %8 = vsyncpa [#allocation3], 0
    %9 = vsyncpa [#allocation6], 0
    %10 = vsyncpa [#allocation4], 0
    // Predicated region
    $region2: #{_pet_decode_call.1} parent=1 // pred_check
      _
    $region3: #{_pet_decode_call.1} parent=1 // pred_check_branch
      %12 = sbr.rel (0) target = $region5
    $region4: #{_pet_decode_call.1} parent=1 // pred_region
      %14 = vsyncadd [#allocation3], 0
      %s16 = sshll.u32 %s0, 4
      %s17 = int_to_ptr.hbm [resolvable:$true] %s16
      %s18 = sshll.u32 [#allocation2], 4
      %s19 = int_to_ptr.vmem [resolvable:$true] %s18
      %21 = dma.hbm_to_vmem [thread:$0]  %s17, 16, %s19, [#allocation3]
    $region5: #{_pet_decode_call.1} parent=1 // pred_fallthru
      _
    // Predicated region
    $region6: #{_pet_decode_call.1} parent=1 // pred_check
      _
    $region7: #{_pet_decode_call.1} parent=1 // pred_check_branch
      %23 = sbr.rel (0) target = $region9
    $region8: #{_pet_decode_call.1} parent=1 // pred_region
      %25 = vsyncadd [#allocation6], 0
      %s26 = sshll.u32 %s1, 4
      %s27 = int_to_ptr.hbm [resolvable:$true] %s26
      %s28 = sshll.u32 [#allocation5], 4
      %s29 = int_to_ptr.vmem [resolvable:$true] %s28
      %34 = dma.hbm_to_vmem [thread:$0]  %s27, 16384, %s29, [#allocation6], 4096, 4096, 256
    $region9: #{_pet_decode_call.1} parent=1 // pred_fallthru
      _
    // Predicated region
    $region10: #{_pet_decode_call.1} parent=1 // pred_check
      _
    $region11: #{_pet_decode_call.1} parent=1 // pred_check_branch
      %36 = sbr.rel (0) target = $region13
    $region12: #{_pet_decode_call.1} parent=1 // pred_region
      %38 = vsyncadd [#allocation6], 0
      %s40 = sshll.u32 %s2, 4
      %s41 = int_to_ptr.hbm [resolvable:$true] %s40
      %s42 = sshll.u32 [#allocation7], 4
      %s43 = int_to_ptr.vmem [resolvable:$true] %s42
      %45 = dma.hbm_to_vmem [thread:$0]  %s41, 512, %s43, [#allocation6]
    $region13: #{_pet_decode_call.1} parent=1 // pred_fallthru
      _
    // Predicated region
    $region14: #{_pet_decode_call.1} parent=1 // pred_check
      _
    $region15: #{_pet_decode_call.1} parent=1 // pred_check_branch
      %47 = sbr.rel (0) target = $region17
    $region16: #{_pet_decode_call.1} parent=1 // pred_region
      %49 = dma.done [#allocation3], 16
    $region17: #{_pet_decode_call.1} parent=1 // pred_fallthru
      _
    // Predicated region
    $region18: #{_pet_decode_call.1} parent=1 // pred_check
      _
    $region19: #{_pet_decode_call.1} parent=1 // pred_check_branch
      %51 = sbr.rel (0) target = $region21
    $region20: #{_pet_decode_call.1} parent=1 // pred_region
      %53 = dma.done [#allocation6], 16384
    $region21: #{_pet_decode_call.1} parent=1 // pred_fallthru
      _
    // Predicated region
    $region22: #{_pet_decode_call.1} parent=1 // pred_check
      _
    $region23: #{_pet_decode_call.1} parent=1 // pred_check_branch
      %55 = sbr.rel (0) target = $region25
    $region24: #{_pet_decode_call.1} parent=1 // pred_region
      %57 = dma.done [#allocation6], 512
    $region25: #{_pet_decode_call.1} parent=1 // pred_fallthru
      _
    %v58 = vld [vmem:[#allocation2] sm:$0x1]
    %v59 = vld [vmem:[#allocation5] sm:$0xff]
    %v60 = vld [vmem:[#allocation5 + $0x8] sm:$0xff]
    %v61 = vld [vmem:[#allocation5 + $0x10] sm:$0xff]
    %v62 = vld [vmem:[#allocation5 + $0x18] sm:$0xff]
    %v63 = vld [vmem:[#allocation5 + $0x20] sm:$0xff]
    %v64 = vld [vmem:[#allocation5 + $0x28] sm:$0xff]
    %v65 = vld [vmem:[#allocation5 + $0x30] sm:$0xff]
    %v66 = vld [vmem:[#allocation5 + $0x38] sm:$0xff]
    %v67 = vld [vmem:[#allocation5 + $0x40] sm:$0xff]
    %v68 = vld [vmem:[#allocation5 + $0x48] sm:$0xff]
    %v69 = vld [vmem:[#allocation5 + $0x50] sm:$0xff]
    %v70 = vld [vmem:[#allocation5 + $0x58] sm:$0xff]
    %v71 = vld [vmem:[#allocation5 + $0x60] sm:$0xff]
    %v72 = vld [vmem:[#allocation5 + $0x68] sm:$0xff]
    %v73 = vld [vmem:[#allocation5 + $0x70] sm:$0xff]
    %v74 = vld [vmem:[#allocation5 + $0x78] sm:$0xff]
    %v75 = vld [vmem:[#allocation5 + $0x80] sm:$0xff]
    %v76 = vld [vmem:[#allocation5 + $0x88] sm:$0xff]
    %v77 = vld [vmem:[#allocation5 + $0x90] sm:$0xff]
    %v78 = vld [vmem:[#allocation5 + $0x98] sm:$0xff]
    %v79 = vld [vmem:[#allocation5 + $0xa0] sm:$0xff]
    %v80 = vld [vmem:[#allocation5 + $0xa8] sm:$0xff]
    %v81 = vld [vmem:[#allocation5 + $0xb0] sm:$0xff]
    %v82 = vld [vmem:[#allocation5 + $0xb8] sm:$0xff]
    %v83 = vld [vmem:[#allocation5 + $0xc0] sm:$0xff]
    %v84 = vld [vmem:[#allocation5 + $0xc8] sm:$0xff]
    %v85 = vld [vmem:[#allocation5 + $0xd0] sm:$0xff]
    %v86 = vld [vmem:[#allocation5 + $0xd8] sm:$0xff]
    %v87 = vld [vmem:[#allocation5 + $0xe0] sm:$0xff]
    %v88 = vld [vmem:[#allocation5 + $0xe8] sm:$0xff]
    %v89 = vld [vmem:[#allocation5 + $0xf0] sm:$0xff]
    %v90 = vld [vmem:[#allocation5 + $0xf8] sm:$0xff]
    %v91 = vld [vmem:[#allocation5 + $0x100] sm:$0xff]
    %v92 = vld [vmem:[#allocation5 + $0x108] sm:$0xff]
    %v93 = vld [vmem:[#allocation5 + $0x110] sm:$0xff]
    %v94 = vld [vmem:[#allocation5 + $0x118] sm:$0xff]
    %v95 = vld [vmem:[#allocation5 + $0x120] sm:$0xff]
    %v96 = vld [vmem:[#allocation5 + $0x128] sm:$0xff]
    %v97 = vld [vmem:[#allocation5 + $0x130] sm:$0xff]
    %v98 = vld [vmem:[#allocation5 + $0x138] sm:$0xff]
    %v99 = vld [vmem:[#allocation5 + $0x140] sm:$0xff]
    %v100 = vld [vmem:[#allocation5 + $0x148] sm:$0xff]
    %v101 = vld [vmem:[#allocation5 + $0x150] sm:$0xff]
    %v102 = vld [vmem:[#allocation5 + $0x158] sm:$0xff]
    %v103 = vld [vmem:[#allocation5 + $0x160] sm:$0xff]
    %v104 = vld [vmem:[#allocation5 + $0x168] sm:$0xff]
    %v105 = vld [vmem:[#allocation5 + $0x170] sm:$0xff]
    %v106 = vld [vmem:[#allocation5 + $0x178] sm:$0xff]
    %v107 = vld [vmem:[#allocation5 + $0x180] sm:$0xff]
    %v108 = vld [vmem:[#allocation5 + $0x188] sm:$0xff]
    %v109 = vld [vmem:[#allocation5 + $0x190] sm:$0xff]
    %v110 = vld [vmem:[#allocation5 + $0x198] sm:$0xff]
    %v111 = vld [vmem:[#allocation5 + $0x1a0] sm:$0xff]
    %v112 = vld [vmem:[#allocation5 + $0x1a8] sm:$0xff]
    %v113 = vld [vmem:[#allocation5 + $0x1b0] sm:$0xff]
    %v114 = vld [vmem:[#allocation5 + $0x1b8] sm:$0xff]
    %v115 = vld [vmem:[#allocation5 + $0x1c0] sm:$0xff]
    %v116 = vld [vmem:[#allocation5 + $0x1c8] sm:$0xff]
    %v117 = vld [vmem:[#allocation5 + $0x1d0] sm:$0xff]
    %v118 = vld [vmem:[#allocation5 + $0x1d8] sm:$0xff]
    %v119 = vld [vmem:[#allocation5 + $0x1e0] sm:$0xff]
    %v120 = vld [vmem:[#allocation5 + $0x1e8] sm:$0xff]
    %v121 = vld [vmem:[#allocation5 + $0x1f0] sm:$0xff]
    %v122 = vld [vmem:[#allocation5 + $0x1f8] sm:$0xff]
    %v123 = vld [vmem:[#allocation5 + $0x200] sm:$0xff]
    %v124 = vld [vmem:[#allocation5 + $0x208] sm:$0xff]
    %v125 = vld [vmem:[#allocation5 + $0x210] sm:$0xff]
    %v126 = vld [vmem:[#allocation5 + $0x218] sm:$0xff]
    %v127 = vld [vmem:[#allocation5 + $0x220] sm:$0xff]
    %v128 = vld [vmem:[#allocation5 + $0x228] sm:$0xff]
    %v129 = vld [vmem:[#allocation5 + $0x230] sm:$0xff]
    %v130 = vld [vmem:[#allocation5 + $0x238] sm:$0xff]
    %v131 = vld [vmem:[#allocation5 + $0x240] sm:$0xff]
    %v132 = vld [vmem:[#allocation5 + $0x248] sm:$0xff]
    %v133 = vld [vmem:[#allocation5 + $0x250] sm:$0xff]
    %v134 = vld [vmem:[#allocation5 + $0x258] sm:$0xff]
    %v135 = vld [vmem:[#allocation5 + $0x260] sm:$0xff]
    %v136 = vld [vmem:[#allocation5 + $0x268] sm:$0xff]
    %v137 = vld [vmem:[#allocation5 + $0x270] sm:$0xff]
    %v138 = vld [vmem:[#allocation5 + $0x278] sm:$0xff]
    %v139 = vld [vmem:[#allocation5 + $0x280] sm:$0xff]
    %v140 = vld [vmem:[#allocation5 + $0x288] sm:$0xff]
    %v141 = vld [vmem:[#allocation5 + $0x290] sm:$0xff]
    %v142 = vld [vmem:[#allocation5 + $0x298] sm:$0xff]
    %v143 = vld [vmem:[#allocation5 + $0x2a0] sm:$0xff]
    %v144 = vld [vmem:[#allocation5 + $0x2a8] sm:$0xff]
    %v145 = vld [vmem:[#allocation5 + $0x2b0] sm:$0xff]
    %v146 = vld [vmem:[#allocation5 + $0x2b8] sm:$0xff]
    %v147 = vld [vmem:[#allocation5 + $0x2c0] sm:$0xff]
    %v148 = vld [vmem:[#allocation5 + $0x2c8] sm:$0xff]
    %v149 = vld [vmem:[#allocation5 + $0x2d0] sm:$0xff]
    %v150 = vld [vmem:[#allocation5 + $0x2d8] sm:$0xff]
    %v151 = vld [vmem:[#allocation5 + $0x2e0] sm:$0xff]
    %v152 = vld [vmem:[#allocation5 + $0x2e8] sm:$0xff]
    %v153 = vld [vmem:[#allocation5 + $0x2f0] sm:$0xff]
    %v154 = vld [vmem:[#allocation5 + $0x2f8] sm:$0xff]
    %v155 = vld [vmem:[#allocation5 + $0x300] sm:$0xff]
    %v156 = vld [vmem:[#allocation5 + $0x308] sm:$0xff]
    %v157 = vld [vmem:[#allocation5 + $0x310] sm:$0xff]
    %v158 = vld [vmem:[#allocation5 + $0x318] sm:$0xff]
    %v159 = vld [vmem:[#allocation5 + $0x320] sm:$0xff]
    %v160 = vld [vmem:[#allocation5 + $0x328] sm:$0xff]
    %v161 = vld [vmem:[#allocation5 + $0x330] sm:$0xff]
    %v162 = vld [vmem:[#allocation5 + $0x338] sm:$0xff]
    %v163 = vld [vmem:[#allocation5 + $0x340] sm:$0xff]
    %v164 = vld [vmem:[#allocation5 + $0x348] sm:$0xff]
    %v165 = vld [vmem:[#allocation5 + $0x350] sm:$0xff]
    %v166 = vld [vmem:[#allocation5 + $0x358] sm:$0xff]
    %v167 = vld [vmem:[#allocation5 + $0x360] sm:$0xff]
    %v168 = vld [vmem:[#allocation5 + $0x368] sm:$0xff]
    %v169 = vld [vmem:[#allocation5 + $0x370] sm:$0xff]
    %v170 = vld [vmem:[#allocation5 + $0x378] sm:$0xff]
    %v171 = vld [vmem:[#allocation5 + $0x380] sm:$0xff]
    %v172 = vld [vmem:[#allocation5 + $0x388] sm:$0xff]
    %v173 = vld [vmem:[#allocation5 + $0x390] sm:$0xff]
    %v174 = vld [vmem:[#allocation5 + $0x398] sm:$0xff]
    %v175 = vld [vmem:[#allocation5 + $0x3a0] sm:$0xff]
    %v176 = vld [vmem:[#allocation5 + $0x3a8] sm:$0xff]
    %v177 = vld [vmem:[#allocation5 + $0x3b0] sm:$0xff]
    %v178 = vld [vmem:[#allocation5 + $0x3b8] sm:$0xff]
    %v179 = vld [vmem:[#allocation5 + $0x3c0] sm:$0xff]
    %v180 = vld [vmem:[#allocation5 + $0x3c8] sm:$0xff]
    %v181 = vld [vmem:[#allocation5 + $0x3d0] sm:$0xff]
    %v182 = vld [vmem:[#allocation5 + $0x3d8] sm:$0xff]
    %v183 = vld [vmem:[#allocation5 + $0x3e0] sm:$0xff]
    %v184 = vld [vmem:[#allocation5 + $0x3e8] sm:$0xff]
    %v185 = vld [vmem:[#allocation5 + $0x3f0] sm:$0xff]
    %v186 = vld [vmem:[#allocation5 + $0x3f8] sm:$0xff]
    %v187 = vld [vmem:[#allocation7] sm:$0xff]
    %v188 = vld [vmem:[#allocation7 + $0x8] sm:$0xff]
    %v189 = vld [vmem:[#allocation7 + $0x10] sm:$0xff]
    %v190 = vld [vmem:[#allocation7 + $0x18] sm:$0xff]
    %v195 = vperm.slane %v187, 0
    %v196 = vperm.slane %v187, 1
    %v197 = vperm.slane %v187, 2
    %v198 = vperm.slane %v187, 3
    %v199 = vperm.slane %v187, 4
    %v200 = vperm.slane %v187, 5
    %v201 = vperm.slane %v187, 6
    %v202 = vperm.slane %v187, 7
    %v203 = vperm.slane %v188, 0
    %v204 = vperm.slane %v188, 1
    %v205 = vperm.slane %v188, 2
    %v206 = vperm.slane %v188, 3
    %v207 = vperm.slane %v188, 4
    %v208 = vperm.slane %v188, 5
    %v209 = vperm.slane %v188, 6
    %v210 = vperm.slane %v188, 7
    %v211 = vperm.slane %v189, 0
    %v212 = vperm.slane %v189, 1
    %v213 = vperm.slane %v189, 2
    %v214 = vperm.slane %v189, 3
    %v215 = vperm.slane %v189, 4
    %v216 = vperm.slane %v189, 5
    %v217 = vperm.slane %v189, 6
    %v218 = vperm.slane %v189, 7
    %v219 = vperm.slane %v190, 0
    %v220 = vperm.slane %v190, 1
    %v221 = vperm.slane %v190, 2
    %v222 = vperm.slane %v190, 3
    %v223 = vperm.slane %v190, 4
    %v224 = vperm.slane %v190, 5
    %v225 = vperm.slane %v190, 6
    %v226 = vperm.slane %v190, 7
    %vm259 = vcmask 261120
    %v261 = vsel %vm259, %v58, 0
    %263 = vmatpush.msra.mxu0 0.0
    %264 = vmatpush.msra.mxu0 0.0
    %265 = vmatpush.msra.mxu0 0.0
    %266 = vmatpush.msra.mxu0 0.0
    %267 = vmatpush.msra.mxu0 0.0
    %268 = vmatpush.msra.mxu0 0.0
    %269 = vmatpush.msra.mxu0 0.0
    %270 = vmatpush.msra.mxu0 0.0
    %271 = vmatpush.msra.mxu0 0.0
    %272 = vmatpush.msra.mxu0 0.0
    %273 = vmatpush.msra.mxu0 0.0
    %274 = vmatpush.msra.mxu0 0.0
    %275 = vmatpush.msra.mxu0 %v155
    %276 = vmatpush.msra.mxu0 %v123
    %277 = vmatpush.msra.mxu0 %v91
    %278 = vmatpush.msra.mxu0 %v59
    %279 = vmatmul.f32.gmra.mxu0 %v261
    %v280 = vpop.f32.mrf.mxu0
    %v281 = vadd.f32 %v195, %v280
    %282 = vdwg.mxu0
    %283 = vmatpush.msra.mxu0 0.0
    %284 = vmatpush.msra.mxu0 0.0
    %285 = vmatpush.msra.mxu0 0.0
    %286 = vmatpush.msra.mxu0 0.0
    %287 = vmatpush.msra.mxu0 0.0
    %288 = vmatpush.msra.mxu0 0.0
    %289 = vmatpush.msra.mxu0 0.0
    %290 = vmatpush.msra.mxu0 0.0
    %291 = vmatpush.msra.mxu0 0.0
    %292 = vmatpush.msra.mxu0 0.0
    %293 = vmatpush.msra.mxu0 0.0
    %294 = vmatpush.msra.mxu0 0.0
    %295 = vmatpush.msra.mxu0 %v156
    %296 = vmatpush.msra.mxu0 %v124
    %297 = vmatpush.msra.mxu0 %v92
    %298 = vmatpush.msra.mxu0 %v60
    %299 = vmatmul.f32.gmra.mxu0 %v261
    %v300 = vpop.f32.mrf.mxu0
    %v301 = vadd.f32 %v196, %v300
    %302 = vdwg.mxu0
    %303 = vmatpush.msra.mxu0 0.0
    %304 = vmatpush.msra.mxu0 0.0
    %305 = vmatpush.msra.mxu0 0.0
    %306 = vmatpush.msra.mxu0 0.0
    %307 = vmatpush.msra.mxu0 0.0
    %308 = vmatpush.msra.mxu0 0.0
    %309 = vmatpush.msra.mxu0 0.0
    %310 = vmatpush.msra.mxu0 0.0
    %311 = vmatpush.msra.mxu0 0.0
    %312 = vmatpush.msra.mxu0 0.0
    %313 = vmatpush.msra.mxu0 0.0
    %314 = vmatpush.msra.mxu0 0.0
    %315 = vmatpush.msra.mxu0 %v157
    %316 = vmatpush.msra.mxu0 %v125
    %317 = vmatpush.msra.mxu0 %v93
    %318 = vmatpush.msra.mxu0 %v61
    %319 = vmatmul.f32.gmra.mxu0 %v261
    %v320 = vpop.f32.mrf.mxu0
    %v321 = vadd.f32 %v197, %v320
    %322 = vdwg.mxu0
    %323 = vmatpush.msra.mxu0 0.0
    %324 = vmatpush.msra.mxu0 0.0
    %325 = vmatpush.msra.mxu0 0.0
    %326 = vmatpush.msra.mxu0 0.0
    %327 = vmatpush.msra.mxu0 0.0
    %328 = vmatpush.msra.mxu0 0.0
    %329 = vmatpush.msra.mxu0 0.0
    %330 = vmatpush.msra.mxu0 0.0
    %331 = vmatpush.msra.mxu0 0.0
    %332 = vmatpush.msra.mxu0 0.0
    %333 = vmatpush.msra.mxu0 0.0
    %334 = vmatpush.msra.mxu0 0.0
    %335 = vmatpush.msra.mxu0 %v158
    %336 = vmatpush.msra.mxu0 %v126
    %337 = vmatpush.msra.mxu0 %v94
    %338 = vmatpush.msra.mxu0 %v62
    %339 = vmatmul.f32.gmra.mxu0 %v261
    %v340 = vpop.f32.mrf.mxu0
    %v341 = vadd.f32 %v198, %v340
    %342 = vdwg.mxu0
    %343 = vmatpush.msra.mxu0 0.0
    %344 = vmatpush.msra.mxu0 0.0
    %345 = vmatpush.msra.mxu0 0.0
    %346 = vmatpush.msra.mxu0 0.0
    %347 = vmatpush.msra.mxu0 0.0
    %348 = vmatpush.msra.mxu0 0.0
    %349 = vmatpush.msra.mxu0 0.0
    %350 = vmatpush.msra.mxu0 0.0
    %351 = vmatpush.msra.mxu0 0.0
    %352 = vmatpush.msra.mxu0 0.0
    %353 = vmatpush.msra.mxu0 0.0
    %354 = vmatpush.msra.mxu0 0.0
    %355 = vmatpush.msra.mxu0 %v159
    %356 = vmatpush.msra.mxu0 %v127
    %357 = vmatpush.msra.mxu0 %v95
    %358 = vmatpush.msra.mxu0 %v63
    %359 = vmatmul.f32.gmra.mxu0 %v261
    %v360 = vpop.f32.mrf.mxu0
    %v361 = vadd.f32 %v199, %v360
    %362 = vdwg.mxu0
    %363 = vmatpush.msra.mxu0 0.0
    %364 = vmatpush.msra.mxu0 0.0
    %365 = vmatpush.msra.mxu0 0.0
    %366 = vmatpush.msra.mxu0 0.0
    %367 = vmatpush.msra.mxu0 0.0
    %368 = vmatpush.msra.mxu0 0.0
    %369 = vmatpush.msra.mxu0 0.0
    %370 = vmatpush.msra.mxu0 0.0
    %371 = vmatpush.msra.mxu0 0.0
    %372 = vmatpush.msra.mxu0 0.0
    %373 = vmatpush.msra.mxu0 0.0
    %374 = vmatpush.msra.mxu0 0.0
    %375 = vmatpush.msra.mxu0 %v160
    %376 = vmatpush.msra.mxu0 %v128
    %377 = vmatpush.msra.mxu0 %v96
    %378 = vmatpush.msra.mxu0 %v64
    %379 = vmatmul.f32.gmra.mxu0 %v261
    %v380 = vpop.f32.mrf.mxu0
    %v381 = vadd.f32 %v200, %v380
    %382 = vdwg.mxu0
    %383 = vmatpush.msra.mxu0 0.0
    %384 = vmatpush.msra.mxu0 0.0
    %385 = vmatpush.msra.mxu0 0.0
    %386 = vmatpush.msra.mxu0 0.0
    %387 = vmatpush.msra.mxu0 0.0
    %388 = vmatpush.msra.mxu0 0.0
    %389 = vmatpush.msra.mxu0 0.0
    %390 = vmatpush.msra.mxu0 0.0
    %391 = vmatpush.msra.mxu0 0.0
    %392 = vmatpush.msra.mxu0 0.0
    %393 = vmatpush.msra.mxu0 0.0
    %394 = vmatpush.msra.mxu0 0.0
    %395 = vmatpush.msra.mxu0 %v161
    %396 = vmatpush.msra.mxu0 %v129
    %397 = vmatpush.msra.mxu0 %v97
    %398 = vmatpush.msra.mxu0 %v65
    %399 = vmatmul.f32.gmra.mxu0 %v261
    %v400 = vpop.f32.mrf.mxu0
    %v401 = vadd.f32 %v201, %v400
    %402 = vdwg.mxu0
    %403 = vmatpush.msra.mxu0 0.0
    %404 = vmatpush.msra.mxu0 0.0
    %405 = vmatpush.msra.mxu0 0.0
    %406 = vmatpush.msra.mxu0 0.0
    %407 = vmatpush.msra.mxu0 0.0
    %408 = vmatpush.msra.mxu0 0.0
    %409 = vmatpush.msra.mxu0 0.0
    %410 = vmatpush.msra.mxu0 0.0
    %411 = vmatpush.msra.mxu0 0.0
    %412 = vmatpush.msra.mxu0 0.0
    %413 = vmatpush.msra.mxu0 0.0
    %414 = vmatpush.msra.mxu0 0.0
    %415 = vmatpush.msra.mxu0 %v162
    %416 = vmatpush.msra.mxu0 %v130
    %417 = vmatpush.msra.mxu0 %v98
    %418 = vmatpush.msra.mxu0 %v66
    %419 = vmatmul.f32.gmra.mxu0 %v261
    %v420 = vpop.f32.mrf.mxu0
    %v421 = vadd.f32 %v202, %v420
    %422 = vdwg.mxu0
    %423 = vmatpush.msra.mxu0 0.0
    %424 = vmatpush.msra.mxu0 0.0
    %425 = vmatpush.msra.mxu0 0.0
    %426 = vmatpush.msra.mxu0 0.0
    %427 = vmatpush.msra.mxu0 0.0
    %428 = vmatpush.msra.mxu0 0.0
    %429 = vmatpush.msra.mxu0 0.0
    %430 = vmatpush.msra.mxu0 0.0
    %431 = vmatpush.msra.mxu0 0.0
    %432 = vmatpush.msra.mxu0 0.0
    %433 = vmatpush.msra.mxu0 0.0
    %434 = vmatpush.msra.mxu0 0.0
    %435 = vmatpush.msra.mxu0 %v163
    %436 = vmatpush.msra.mxu0 %v131
    %437 = vmatpush.msra.mxu0 %v99
    %438 = vmatpush.msra.mxu0 %v67
    %439 = vmatmul.f32.gmra.mxu0 %v261
    %v440 = vpop.f32.mrf.mxu0
    %v441 = vadd.f32 %v203, %v440
    %442 = vdwg.mxu0
    %443 = vmatpush.msra.mxu0 0.0
    %444 = vmatpush.msra.mxu0 0.0
    %445 = vmatpush.msra.mxu0 0.0
    %446 = vmatpush.msra.mxu0 0.0
    %447 = vmatpush.msra.mxu0 0.0
    %448 = vmatpush.msra.mxu0 0.0
    %449 = vmatpush.msra.mxu0 0.0
    %450 = vmatpush.msra.mxu0 0.0
    %451 = vmatpush.msra.mxu0 0.0
    %452 = vmatpush.msra.mxu0 0.0
    %453 = vmatpush.msra.mxu0 0.0
    %454 = vmatpush.msra.mxu0 0.0
    %455 = vmatpush.msra.mxu0 %v164
    %456 = vmatpush.msra.mxu0 %v132
    %457 = vmatpush.msra.mxu0 %v100
    %458 = vmatpush.msra.mxu0 %v68
    %459 = vmatmul.f32.gmra.mxu0 %v261
    %v460 = vpop.f32.mrf.mxu0
    %v461 = vadd.f32 %v204, %v460
    %462 = vdwg.mxu0
    %463 = vmatpush.msra.mxu0 0.0
    %464 = vmatpush.msra.mxu0 0.0
    %465 = vmatpush.msra.mxu0 0.0
    %466 = vmatpush.msra.mxu0 0.0
    %467 = vmatpush.msra.mxu0 0.0
    %468 = vmatpush.msra.mxu0 0.0
    %469 = vmatpush.msra.mxu0 0.0
    %470 = vmatpush.msra.mxu0 0.0
    %471 = vmatpush.msra.mxu0 0.0
    %472 = vmatpush.msra.mxu0 0.0
    %473 = vmatpush.msra.mxu0 0.0
    %474 = vmatpush.msra.mxu0 0.0
    %475 = vmatpush.msra.mxu0 %v165
    %476 = vmatpush.msra.mxu0 %v133
    %477 = vmatpush.msra.mxu0 %v101
    %478 = vmatpush.msra.mxu0 %v69
    %479 = vmatmul.f32.gmra.mxu0 %v261
    %v480 = vpop.f32.mrf.mxu0
    %v481 = vadd.f32 %v205, %v480
    %482 = vdwg.mxu0
    %483 = vmatpush.msra.mxu0 0.0
    %484 = vmatpush.msra.mxu0 0.0
    %485 = vmatpush.msra.mxu0 0.0
    %486 = vmatpush.msra.mxu0 0.0
    %487 = vmatpush.msra.mxu0 0.0
    %488 = vmatpush.msra.mxu0 0.0
    %489 = vmatpush.msra.mxu0 0.0
    %490 = vmatpush.msra.mxu0 0.0
    %491 = vmatpush.msra.mxu0 0.0
    %492 = vmatpush.msra.mxu0 0.0
    %493 = vmatpush.msra.mxu0 0.0
    %494 = vmatpush.msra.mxu0 0.0
    %495 = vmatpush.msra.mxu0 %v166
    %496 = vmatpush.msra.mxu0 %v134
    %497 = vmatpush.msra.mxu0 %v102
    %498 = vmatpush.msra.mxu0 %v70
    %499 = vmatmul.f32.gmra.mxu0 %v261
    %v500 = vpop.f32.mrf.mxu0
    %v501 = vadd.f32 %v206, %v500
    %502 = vdwg.mxu0
    %503 = vmatpush.msra.mxu0 0.0
    %504 = vmatpush.msra.mxu0 0.0
    %505 = vmatpush.msra.mxu0 0.0
    %506 = vmatpush.msra.mxu0 0.0
    %507 = vmatpush.msra.mxu0 0.0
    %508 = vmatpush.msra.mxu0 0.0
    %509 = vmatpush.msra.mxu0 0.0
    %510 = vmatpush.msra.mxu0 0.0
    %511 = vmatpush.msra.mxu0 0.0
    %512 = vmatpush.msra.mxu0 0.0
    %513 = vmatpush.msra.mxu0 0.0
    %514 = vmatpush.msra.mxu0 0.0
    %515 = vmatpush.msra.mxu0 %v167
    %516 = vmatpush.msra.mxu0 %v135
    %517 = vmatpush.msra.mxu0 %v103
    %518 = vmatpush.msra.mxu0 %v71
    %519 = vmatmul.f32.gmra.mxu0 %v261
    %v520 = vpop.f32.mrf.mxu0
    %v521 = vadd.f32 %v207, %v520
    %522 = vdwg.mxu0
    %523 = vmatpush.msra.mxu0 0.0
    %524 = vmatpush.msra.mxu0 0.0
    %525 = vmatpush.msra.mxu0 0.0
    %526 = vmatpush.msra.mxu0 0.0
    %527 = vmatpush.msra.mxu0 0.0
    %528 = vmatpush.msra.mxu0 0.0
    %529 = vmatpush.msra.mxu0 0.0
    %530 = vmatpush.msra.mxu0 0.0
    %531 = vmatpush.msra.mxu0 0.0
    %532 = vmatpush.msra.mxu0 0.0
    %533 = vmatpush.msra.mxu0 0.0
    %534 = vmatpush.msra.mxu0 0.0
    %535 = vmatpush.msra.mxu0 %v168
    %536 = vmatpush.msra.mxu0 %v136
    %537 = vmatpush.msra.mxu0 %v104
    %538 = vmatpush.msra.mxu0 %v72
    %539 = vmatmul.f32.gmra.mxu0 %v261
    %v540 = vpop.f32.mrf.mxu0
    %v541 = vadd.f32 %v208, %v540
    %542 = vdwg.mxu0
    %543 = vmatpush.msra.mxu0 0.0
    %544 = vmatpush.msra.mxu0 0.0
    %545 = vmatpush.msra.mxu0 0.0
    %546 = vmatpush.msra.mxu0 0.0
    %547 = vmatpush.msra.mxu0 0.0
    %548 = vmatpush.msra.mxu0 0.0
    %549 = vmatpush.msra.mxu0 0.0
    %550 = vmatpush.msra.mxu0 0.0
    %551 = vmatpush.msra.mxu0 0.0
    %552 = vmatpush.msra.mxu0 0.0
    %553 = vmatpush.msra.mxu0 0.0
    %554 = vmatpush.msra.mxu0 0.0
    %555 = vmatpush.msra.mxu0 %v169
    %556 = vmatpush.msra.mxu0 %v137
    %557 = vmatpush.msra.mxu0 %v105
    %558 = vmatpush.msra.mxu0 %v73
    %559 = vmatmul.f32.gmra.mxu0 %v261
    %v560 = vpop.f32.mrf.mxu0
    %v561 = vadd.f32 %v209, %v560
    %562 = vdwg.mxu0
    %563 = vmatpush.msra.mxu0 0.0
    %564 = vmatpush.msra.mxu0 0.0
    %565 = vmatpush.msra.mxu0 0.0
    %566 = vmatpush.msra.mxu0 0.0
    %567 = vmatpush.msra.mxu0 0.0
    %568 = vmatpush.msra.mxu0 0.0
    %569 = vmatpush.msra.mxu0 0.0
    %570 = vmatpush.msra.mxu0 0.0
    %571 = vmatpush.msra.mxu0 0.0
    %572 = vmatpush.msra.mxu0 0.0
    %573 = vmatpush.msra.mxu0 0.0
    %574 = vmatpush.msra.mxu0 0.0
    %575 = vmatpush.msra.mxu0 %v170
    %576 = vmatpush.msra.mxu0 %v138
    %577 = vmatpush.msra.mxu0 %v106
    %578 = vmatpush.msra.mxu0 %v74
    %579 = vmatmul.f32.gmra.mxu0 %v261
    %v580 = vpop.f32.mrf.mxu0
    %v581 = vadd.f32 %v210, %v580
    %582 = vdwg.mxu0
    %583 = vmatpush.msra.mxu0 0.0
    %584 = vmatpush.msra.mxu0 0.0
    %585 = vmatpush.msra.mxu0 0.0
    %586 = vmatpush.msra.mxu0 0.0
    %587 = vmatpush.msra.mxu0 0.0
    %588 = vmatpush.msra.mxu0 0.0
    %589 = vmatpush.msra.mxu0 0.0
    %590 = vmatpush.msra.mxu0 0.0
    %591 = vmatpush.msra.mxu0 0.0
    %592 = vmatpush.msra.mxu0 0.0
    %593 = vmatpush.msra.mxu0 0.0
    %594 = vmatpush.msra.mxu0 0.0
    %595 = vmatpush.msra.mxu0 %v171
    %596 = vmatpush.msra.mxu0 %v139
    %597 = vmatpush.msra.mxu0 %v107
    %598 = vmatpush.msra.mxu0 %v75
    %599 = vmatmul.f32.gmra.mxu0 %v261
    %v600 = vpop.f32.mrf.mxu0
    %v601 = vadd.f32 %v211, %v600
    %602 = vdwg.mxu0
    %603 = vmatpush.msra.mxu0 0.0
    %604 = vmatpush.msra.mxu0 0.0
    %605 = vmatpush.msra.mxu0 0.0
    %606 = vmatpush.msra.mxu0 0.0
    %607 = vmatpush.msra.mxu0 0.0
    %608 = vmatpush.msra.mxu0 0.0
    %609 = vmatpush.msra.mxu0 0.0
    %610 = vmatpush.msra.mxu0 0.0
    %611 = vmatpush.msra.mxu0 0.0
    %612 = vmatpush.msra.mxu0 0.0
    %613 = vmatpush.msra.mxu0 0.0
    %614 = vmatpush.msra.mxu0 0.0
    %615 = vmatpush.msra.mxu0 %v172
    %616 = vmatpush.msra.mxu0 %v140
    %617 = vmatpush.msra.mxu0 %v108
    %618 = vmatpush.msra.mxu0 %v76
    %619 = vmatmul.f32.gmra.mxu0 %v261
    %v620 = vpop.f32.mrf.mxu0
    %v621 = vadd.f32 %v212, %v620
    %622 = vdwg.mxu0
    %623 = vmatpush.msra.mxu0 0.0
    %624 = vmatpush.msra.mxu0 0.0
    %625 = vmatpush.msra.mxu0 0.0
    %626 = vmatpush.msra.mxu0 0.0
    %627 = vmatpush.msra.mxu0 0.0
    %628 = vmatpush.msra.mxu0 0.0
    %629 = vmatpush.msra.mxu0 0.0
    %630 = vmatpush.msra.mxu0 0.0
    %631 = vmatpush.msra.mxu0 0.0
    %632 = vmatpush.msra.mxu0 0.0
    %633 = vmatpush.msra.mxu0 0.0
    %634 = vmatpush.msra.mxu0 0.0
    %635 = vmatpush.msra.mxu0 %v173
    %636 = vmatpush.msra.mxu0 %v141
    %637 = vmatpush.msra.mxu0 %v109
    %638 = vmatpush.msra.mxu0 %v77
    %639 = vmatmul.f32.gmra.mxu0 %v261
    %v640 = vpop.f32.mrf.mxu0
    %v641 = vadd.f32 %v213, %v640
    %642 = vdwg.mxu0
    %643 = vmatpush.msra.mxu0 0.0
    %644 = vmatpush.msra.mxu0 0.0
    %645 = vmatpush.msra.mxu0 0.0
    %646 = vmatpush.msra.mxu0 0.0
    %647 = vmatpush.msra.mxu0 0.0
    %648 = vmatpush.msra.mxu0 0.0
    %649 = vmatpush.msra.mxu0 0.0
    %650 = vmatpush.msra.mxu0 0.0
    %651 = vmatpush.msra.mxu0 0.0
    %652 = vmatpush.msra.mxu0 0.0
    %653 = vmatpush.msra.mxu0 0.0
    %654 = vmatpush.msra.mxu0 0.0
    %655 = vmatpush.msra.mxu0 %v174
    %656 = vmatpush.msra.mxu0 %v142
    %657 = vmatpush.msra.mxu0 %v110
    %658 = vmatpush.msra.mxu0 %v78
    %659 = vmatmul.f32.gmra.mxu0 %v261
    %v660 = vpop.f32.mrf.mxu0
    %v661 = vadd.f32 %v214, %v660
    %662 = vdwg.mxu0
    %663 = vmatpush.msra.mxu0 0.0
    %664 = vmatpush.msra.mxu0 0.0
    %665 = vmatpush.msra.mxu0 0.0
    %666 = vmatpush.msra.mxu0 0.0
    %667 = vmatpush.msra.mxu0 0.0
    %668 = vmatpush.msra.mxu0 0.0
    %669 = vmatpush.msra.mxu0 0.0
    %670 = vmatpush.msra.mxu0 0.0
    %671 = vmatpush.msra.mxu0 0.0
    %672 = vmatpush.msra.mxu0 0.0
    %673 = vmatpush.msra.mxu0 0.0
    %674 = vmatpush.msra.mxu0 0.0
    %675 = vmatpush.msra.mxu0 %v175
    %676 = vmatpush.msra.mxu0 %v143
    %677 = vmatpush.msra.mxu0 %v111
    %678 = vmatpush.msra.mxu0 %v79
    %679 = vmatmul.f32.gmra.mxu0 %v261
    %v680 = vpop.f32.mrf.mxu0
    %v681 = vadd.f32 %v215, %v680
    %682 = vdwg.mxu0
    %683 = vmatpush.msra.mxu0 0.0
    %684 = vmatpush.msra.mxu0 0.0
    %685 = vmatpush.msra.mxu0 0.0
    %686 = vmatpush.msra.mxu0 0.0
    %687 = vmatpush.msra.mxu0 0.0
    %688 = vmatpush.msra.mxu0 0.0
    %689 = vmatpush.msra.mxu0 0.0
    %690 = vmatpush.msra.mxu0 0.0
    %691 = vmatpush.msra.mxu0 0.0
    %692 = vmatpush.msra.mxu0 0.0
    %693 = vmatpush.msra.mxu0 0.0
    %694 = vmatpush.msra.mxu0 0.0
    %695 = vmatpush.msra.mxu0 %v176
    %696 = vmatpush.msra.mxu0 %v144
    %697 = vmatpush.msra.mxu0 %v112
    %698 = vmatpush.msra.mxu0 %v80
    %699 = vmatmul.f32.gmra.mxu0 %v261
    %v700 = vpop.f32.mrf.mxu0
    %v701 = vadd.f32 %v216, %v700
    %702 = vdwg.mxu0
    %703 = vmatpush.msra.mxu0 0.0
    %704 = vmatpush.msra.mxu0 0.0
    %705 = vmatpush.msra.mxu0 0.0
    %706 = vmatpush.msra.mxu0 0.0
    %707 = vmatpush.msra.mxu0 0.0
    %708 = vmatpush.msra.mxu0 0.0
    %709 = vmatpush.msra.mxu0 0.0
    %710 = vmatpush.msra.mxu0 0.0
    %711 = vmatpush.msra.mxu0 0.0
    %712 = vmatpush.msra.mxu0 0.0
    %713 = vmatpush.msra.mxu0 0.0
    %714 = vmatpush.msra.mxu0 0.0
    %715 = vmatpush.msra.mxu0 %v177
    %716 = vmatpush.msra.mxu0 %v145
    %717 = vmatpush.msra.mxu0 %v113
    %718 = vmatpush.msra.mxu0 %v81
    %719 = vmatmul.f32.gmra.mxu0 %v261
    %v720 = vpop.f32.mrf.mxu0
    %v721 = vadd.f32 %v217, %v720
    %722 = vdwg.mxu0
    %723 = vmatpush.msra.mxu0 0.0
    %724 = vmatpush.msra.mxu0 0.0
    %725 = vmatpush.msra.mxu0 0.0
    %726 = vmatpush.msra.mxu0 0.0
    %727 = vmatpush.msra.mxu0 0.0
    %728 = vmatpush.msra.mxu0 0.0
    %729 = vmatpush.msra.mxu0 0.0
    %730 = vmatpush.msra.mxu0 0.0
    %731 = vmatpush.msra.mxu0 0.0
    %732 = vmatpush.msra.mxu0 0.0
    %733 = vmatpush.msra.mxu0 0.0
    %734 = vmatpush.msra.mxu0 0.0
    %735 = vmatpush.msra.mxu0 %v178
    %736 = vmatpush.msra.mxu0 %v146
    %737 = vmatpush.msra.mxu0 %v114
    %738 = vmatpush.msra.mxu0 %v82
    %739 = vmatmul.f32.gmra.mxu0 %v261
    %v740 = vpop.f32.mrf.mxu0
    %v741 = vadd.f32 %v218, %v740
    %742 = vdwg.mxu0
    %743 = vmatpush.msra.mxu0 0.0
    %744 = vmatpush.msra.mxu0 0.0
    %745 = vmatpush.msra.mxu0 0.0
    %746 = vmatpush.msra.mxu0 0.0
    %747 = vmatpush.msra.mxu0 0.0
    %748 = vmatpush.msra.mxu0 0.0
    %749 = vmatpush.msra.mxu0 0.0
    %750 = vmatpush.msra.mxu0 0.0
    %751 = vmatpush.msra.mxu0 0.0
    %752 = vmatpush.msra.mxu0 0.0
    %753 = vmatpush.msra.mxu0 0.0
    %754 = vmatpush.msra.mxu0 0.0
    %755 = vmatpush.msra.mxu0 %v179
    %756 = vmatpush.msra.mxu0 %v147
    %757 = vmatpush.msra.mxu0 %v115
    %758 = vmatpush.msra.mxu0 %v83
    %759 = vmatmul.f32.gmra.mxu0 %v261
    %v760 = vpop.f32.mrf.mxu0
    %v761 = vadd.f32 %v219, %v760
    %762 = vdwg.mxu0
    %763 = vmatpush.msra.mxu0 0.0
    %764 = vmatpush.msra.mxu0 0.0
    %765 = vmatpush.msra.mxu0 0.0
    %766 = vmatpush.msra.mxu0 0.0
    %767 = vmatpush.msra.mxu0 0.0
    %768 = vmatpush.msra.mxu0 0.0
    %769 = vmatpush.msra.mxu0 0.0
    %770 = vmatpush.msra.mxu0 0.0
    %771 = vmatpush.msra.mxu0 0.0
    %772 = vmatpush.msra.mxu0 0.0
    %773 = vmatpush.msra.mxu0 0.0
    %774 = vmatpush.msra.mxu0 0.0
    %775 = vmatpush.msra.mxu0 %v180
    %776 = vmatpush.msra.mxu0 %v148
    %777 = vmatpush.msra.mxu0 %v116
    %778 = vmatpush.msra.mxu0 %v84
    %779 = vmatmul.f32.gmra.mxu0 %v261
    %v780 = vpop.f32.mrf.mxu0
    %v781 = vadd.f32 %v220, %v780
    %782 = vdwg.mxu0
    %783 = vmatpush.msra.mxu0 0.0
    %784 = vmatpush.msra.mxu0 0.0
    %785 = vmatpush.msra.mxu0 0.0
    %786 = vmatpush.msra.mxu0 0.0
    %787 = vmatpush.msra.mxu0 0.0
    %788 = vmatpush.msra.mxu0 0.0
    %789 = vmatpush.msra.mxu0 0.0
    %790 = vmatpush.msra.mxu0 0.0
    %791 = vmatpush.msra.mxu0 0.0
    %792 = vmatpush.msra.mxu0 0.0
    %793 = vmatpush.msra.mxu0 0.0
    %794 = vmatpush.msra.mxu0 0.0
    %795 = vmatpush.msra.mxu0 %v181
    %796 = vmatpush.msra.mxu0 %v149
    %797 = vmatpush.msra.mxu0 %v117
    %798 = vmatpush.msra.mxu0 %v85
    %799 = vmatmul.f32.gmra.mxu0 %v261
    %v800 = vpop.f32.mrf.mxu0
    %v801 = vadd.f32 %v221, %v800
    %802 = vdwg.mxu0
    %803 = vmatpush.msra.mxu0 0.0
    %804 = vmatpush.msra.mxu0 0.0
    %805 = vmatpush.msra.mxu0 0.0
    %806 = vmatpush.msra.mxu0 0.0
    %807 = vmatpush.msra.mxu0 0.0
    %808 = vmatpush.msra.mxu0 0.0
    %809 = vmatpush.msra.mxu0 0.0
    %810 = vmatpush.msra.mxu0 0.0
    %811 = vmatpush.msra.mxu0 0.0
    %812 = vmatpush.msra.mxu0 0.0
    %813 = vmatpush.msra.mxu0 0.0
    %814 = vmatpush.msra.mxu0 0.0
    %815 = vmatpush.msra.mxu0 %v182
    %816 = vmatpush.msra.mxu0 %v150
    %817 = vmatpush.msra.mxu0 %v118
    %818 = vmatpush.msra.mxu0 %v86
    %819 = vmatmul.f32.gmra.mxu0 %v261
    %v820 = vpop.f32.mrf.mxu0
    %v821 = vadd.f32 %v222, %v820
    %822 = vdwg.mxu0
    %823 = vmatpush.msra.mxu0 0.0
    %824 = vmatpush.msra.mxu0 0.0
    %825 = vmatpush.msra.mxu0 0.0
    %826 = vmatpush.msra.mxu0 0.0
    %827 = vmatpush.msra.mxu0 0.0
    %828 = vmatpush.msra.mxu0 0.0
    %829 = vmatpush.msra.mxu0 0.0
    %830 = vmatpush.msra.mxu0 0.0
    %831 = vmatpush.msra.mxu0 0.0
    %832 = vmatpush.msra.mxu0 0.0
    %833 = vmatpush.msra.mxu0 0.0
    %834 = vmatpush.msra.mxu0 0.0
    %835 = vmatpush.msra.mxu0 %v183
    %836 = vmatpush.msra.mxu0 %v151
    %837 = vmatpush.msra.mxu0 %v119
    %838 = vmatpush.msra.mxu0 %v87
    %839 = vmatmul.f32.gmra.mxu0 %v261
    %v840 = vpop.f32.mrf.mxu0
    %v841 = vadd.f32 %v223, %v840
    %842 = vdwg.mxu0
    %843 = vmatpush.msra.mxu0 0.0
    %844 = vmatpush.msra.mxu0 0.0
    %845 = vmatpush.msra.mxu0 0.0
    %846 = vmatpush.msra.mxu0 0.0
    %847 = vmatpush.msra.mxu0 0.0
    %848 = vmatpush.msra.mxu0 0.0
    %849 = vmatpush.msra.mxu0 0.0
    %850 = vmatpush.msra.mxu0 0.0
    %851 = vmatpush.msra.mxu0 0.0
    %852 = vmatpush.msra.mxu0 0.0
    %853 = vmatpush.msra.mxu0 0.0
    %854 = vmatpush.msra.mxu0 0.0
    %855 = vmatpush.msra.mxu0 %v184
    %856 = vmatpush.msra.mxu0 %v152
    %857 = vmatpush.msra.mxu0 %v120
    %858 = vmatpush.msra.mxu0 %v88
    %859 = vmatmul.f32.gmra.mxu0 %v261
    %v860 = vpop.f32.mrf.mxu0
    %v861 = vadd.f32 %v224, %v860
    %862 = vdwg.mxu0
    %863 = vmatpush.msra.mxu0 0.0
    %864 = vmatpush.msra.mxu0 0.0
    %865 = vmatpush.msra.mxu0 0.0
    %866 = vmatpush.msra.mxu0 0.0
    %867 = vmatpush.msra.mxu0 0.0
    %868 = vmatpush.msra.mxu0 0.0
    %869 = vmatpush.msra.mxu0 0.0
    %870 = vmatpush.msra.mxu0 0.0
    %871 = vmatpush.msra.mxu0 0.0
    %872 = vmatpush.msra.mxu0 0.0
    %873 = vmatpush.msra.mxu0 0.0
    %874 = vmatpush.msra.mxu0 0.0
    %875 = vmatpush.msra.mxu0 %v185
    %876 = vmatpush.msra.mxu0 %v153
    %877 = vmatpush.msra.mxu0 %v121
    %878 = vmatpush.msra.mxu0 %v89
    %879 = vmatmul.f32.gmra.mxu0 %v261
    %v880 = vpop.f32.mrf.mxu0
    %v881 = vadd.f32 %v225, %v880
    %882 = vdwg.mxu0
    %883 = vmatpush.msra.mxu0 0.0
    %884 = vmatpush.msra.mxu0 0.0
    %885 = vmatpush.msra.mxu0 0.0
    %886 = vmatpush.msra.mxu0 0.0
    %887 = vmatpush.msra.mxu0 0.0
    %888 = vmatpush.msra.mxu0 0.0
    %889 = vmatpush.msra.mxu0 0.0
    %890 = vmatpush.msra.mxu0 0.0
    %891 = vmatpush.msra.mxu0 0.0
    %892 = vmatpush.msra.mxu0 0.0
    %893 = vmatpush.msra.mxu0 0.0
    %894 = vmatpush.msra.mxu0 0.0
    %895 = vmatpush.msra.mxu0 %v186
    %896 = vmatpush.msra.mxu0 %v154
    %897 = vmatpush.msra.mxu0 %v122
    %898 = vmatpush.msra.mxu0 %v90
    %899 = vmatmul.f32.gmra.mxu0 %v261
    %v900 = vpop.f32.mrf.mxu0
    %v901 = vadd.f32 %v226, %v900
    %902 = vdwg.mxu0
    %v935 = vrot.slane %v301, 7
    %v936 = vrot.slane %v321, 6
    %v937 = vrot.slane %v341, 5
    %v938 = vrot.slane %v361, 4
    %v939 = vrot.slane %v381, 3
    %v940 = vrot.slane %v401, 2
    %v941 = vrot.slane %v421, 1
    %v942 = vrot.slane %v461, 7
    %v943 = vrot.slane %v481, 6
    %v944 = vrot.slane %v501, 5
    %v945 = vrot.slane %v521, 4
    %v946 = vrot.slane %v541, 3
    %v947 = vrot.slane %v561, 2
    %v948 = vrot.slane %v581, 1
    %v949 = vrot.slane %v621, 7
    %v950 = vrot.slane %v641, 6
    %v951 = vrot.slane %v661, 5
    %v952 = vrot.slane %v681, 4
    %v953 = vrot.slane %v701, 3
    %v954 = vrot.slane %v721, 2
    %v955 = vrot.slane %v741, 1
    %v956 = vrot.slane %v781, 7
    %v957 = vrot.slane %v801, 6
    %v958 = vrot.slane %v821, 5
    %v959 = vrot.slane %v841, 4
    %v960 = vrot.slane %v861, 3
    %v961 = vrot.slane %v881, 2
    %v962 = vrot.slane %v901, 1
    %vm963 = vcmask 1040384
    %v964 = vsel %vm963, %v281, %v935
    %vm965 = vcmask 1042434
    %v966 = vsel %vm965, %v936, %v937
    %vm967 = vcmask 1041408
    %v968 = vsel %vm967, %v964, %v966
    %vm969 = vcmask 1044484
    %v970 = vsel %vm969, %v938, %v939
    %vm971 = vcmask 1046534
    %v972 = vsel %vm971, %v940, %v941
    %vm973 = vcmask 1045508
    %v974 = vsel %vm973, %v970, %v972
    %vm975 = vcmask 1043456
    %v976 = vsel %vm975, %v968, %v974
    %v977 = vsel %vm963, %v441, %v942
    %v978 = vsel %vm965, %v943, %v944
    %v979 = vsel %vm967, %v977, %v978
    %v980 = vsel %vm969, %v945, %v946
    %v981 = vsel %vm971, %v947, %v948
    %v982 = vsel %vm973, %v980, %v981
    %v983 = vsel %vm975, %v979, %v982
    %v984 = vsel %vm963, %v601, %v949
    %v985 = vsel %vm965, %v950, %v951
    %v986 = vsel %vm967, %v984, %v985
    %v987 = vsel %vm969, %v952, %v953
    %v988 = vsel %vm971, %v954, %v955
    %v989 = vsel %vm973, %v987, %v988
    %v990 = vsel %vm975, %v986, %v989
    %v991 = vsel %vm963, %v761, %v956
    %v992 = vsel %vm965, %v957, %v958
    %v993 = vsel %vm967, %v991, %v992
    %v994 = vsel %vm969, %v959, %v960
    %v995 = vsel %vm971, %v961, %v962
    %v996 = vsel %vm973, %v994, %v995
    %v997 = vsel %vm975, %v993, %v996
    %1002 = vst [vmem:[#allocation8] sm:$0xff] %v976
    %1003 = vst [vmem:[#allocation8 + $0x8] sm:$0xff] %v983
    %1004 = vst [vmem:[#allocation8 + $0x10] sm:$0xff] %v990
    %1005 = vst [vmem:[#allocation8 + $0x18] sm:$0xff] %v997
    // Predicated region
    $region26: #{_pet_decode_call.1} parent=1 // pred_check
      _
    $region27: #{_pet_decode_call.1} parent=1 // pred_check_branch
      %1007 = sbr.rel (0) target = $region29
    $region28: #{_pet_decode_call.1} parent=1 // pred_region
      %1009 = vsyncadd [#allocation4], 0
      %s1011 = sshll.u32 [#allocation8], 4
      %s1012 = int_to_ptr.vmem [resolvable:$true] %s1011
      %s1013 = sshll.u32 %s3, 4
      %s1014 = int_to_ptr.hbm [resolvable:$true] %s1013
      %1016 = dma.vmem_to_hbm [thread:$0]  %s1012, 512, %s1014, [#allocation4]
    $region29: #{_pet_decode_call.1} parent=1 // pred_fallthru
      _
    // Predicated region
    $region30: #{_pet_decode_call.1} parent=1 // pred_check
      _
    $region31: #{_pet_decode_call.1} parent=1 // pred_check_branch
      %1018 = sbr.rel (0) target = $region33
    $region32: #{_pet_decode_call.1} parent=1 // pred_region
      %1020 = dma.done [#allocation4], 512
    $region33: #{_pet_decode_call.1} parent=1 // pred_fallthru
      _
    %1021 = vsyncpa [#allocation3], 1
    %1022 = vsyncpa [#allocation6], 1
    %1023 = vsyncpa [#allocation4], 1

</llo_original>
